<compile_context>
chip_gen: v6e
topology: v6e:2x2x1
jax: 0.10.0
libtpu: 0.0.40
codegen_flags: <defaults>
</compile_context>

<pallas_src>
import jax
import jax.numpy as jnp
from jax.experimental import pallas as pl
from jax.experimental.pallas import tpu as pltpu

NUM_SIDE = 6          # d0, d1, d2, d3, d4, d6
LANE = 128
SUBLANE_F32 = 8


def _round_up(x, m):
    return ((x + m - 1) // m) * m


def make_fmd_kernel(chunks, wp):
    """chunks: static tuple of (row_start, num_rows); wp = W + 2 (padded row width)."""

    def kernel(x_ref, wfT_ref, bf_ref, whT_ref, bh_ref, sc_ref, of_ref, out_ref):
        # x_ref : [Cp, Lpad] f32  — zero-padded image, rows flattened onto lanes
        # wfT   : [F, 9*Cp] bf16  — 3x3 conv weights, rows ordered (dh, dw, c)
        # whT   : [opad, F] bf16  — fused head (rec rows pre-scaled by 2, then sides)
        # out   : [opad, H*wp] f32 — channels on sublanes, pixels on lanes
        wfT = wfT_ref[...]
        whT = whT_ref[...]
        bf = bf_ref[...]          # [F, 1]
        bh = bh_ref[...]          # [opad, 1]
        sc = sc_ref[...]          # [opad, 1]  (2 on rec rows, 1 on side rows, 0 on pad)
        of = of_ref[...]          # [opad, 1]  (-1 on rec rows, 0 elsewhere)

        for h0, th in chunks:                      # static python loop (unrolled)
            npix = th * wp
            # In-kernel im2col: the nine (dh, dw) shifted views are contiguous lane
            # slices of the flattened padded image (offset dh*wp + dw).  Each piece
            # is [Cp=8, npix] f32 (one full sublane tile), so the sublane concat is
            # tile-aligned and cheap.
            pieces = [x_ref[:, pl.ds((h0 + dh) * wp + dw, npix)]
                      for dh in range(3) for dw in range(3)]
            p_t = jnp.concatenate(pieces, axis=0).astype(jnp.bfloat16)   # [9*Cp, npix]

            # Shared feature conv (single MXU pass, K = 9*Cp), f32 accumulate + ReLU.
            feat = jnp.dot(wfT, p_t, preferred_element_type=jnp.float32) + bf
            feat = jnp.maximum(feat, 0.0)                                # [F, npix]

            # Fused rec + side heads, then ONE sigmoid and a per-row affine:
            #   rec rows:  head = 2*z  ->  2*sigmoid(2z) - 1 = tanh(z)
            #   side rows: head = z    ->  sigmoid(z)
            head = jnp.dot(whT, feat.astype(jnp.bfloat16),
                           preferred_element_type=jnp.float32) + bh      # [opad, npix]
            out_ref[:, pl.ds(h0 * wp, npix)] = sc * jax.nn.sigmoid(head) + of

    return kernel


def fmd_forward(x_nchw, params, *, chunk_pixels=4096):
    """Forward pass of the (reduced) U2Net-GAN generator.

    Args:
      x_nchw: input images, [N, C, H, W] float32 (PyTorch conv layout).
    Returns:
      (rec_img, d0, d1, d2, d3, d4, d6) — rec_img: [N, C, H, W] (tanh);
      each d_i: [N, 1, H, W], sigmoid-activated.
    """
    n, c, h, w = x_nchw.shape
    w_feat, b_feat, w_rec, b_rec, w_side, b_side = params
    feat_dim = w_feat.shape[-1]

    wp = w + 2                                   # padded row width (incl. halo cols)
    cp = _round_up(c, SUBLANE_F32)               # channel pad -> aligned sublane concat
    opad = _round_up(c + NUM_SIDE, SUBLANE_F32)  # output rows (rec | side | zero pad)
    l_img = (h + 2) * wp
    l_pad = _round_up(l_img + 2, LANE)           # +2 covers the dw-shift of the last row
    l_out = h * wp                               # per-image output lanes (W+2 per row,
                                                 # the two halo columns are sliced off)

    # ---- host-side prep (cheap, single pass over the input, no zeros+at.set glue) --
    xpad = jnp.pad(x_nchw, ((0, 0), (0, cp - c), (1, 1), (1, 1)))        # [N,Cp,H+2,W+2]
    x_flat = jnp.pad(xpad.reshape(n, cp, l_img), ((0, 0), (0, 0), (0, l_pad - l_img)))

    # 3x3 conv weights, row order (dh, dw, channel); zero rows for padded channels.
    wf = jnp.pad(w_feat, ((0, 0), (0, 0), (0, cp - c), (0, 0)))          # [3,3,Cp,F]
    wfT = wf.reshape(9 * cp, feat_dim).T.astype(jnp.bfloat16)            # [F, 9*Cp]
    bf = b_feat.reshape(feat_dim, 1).astype(jnp.float32)

    # Fused head: rec rows pre-scaled by 2 (tanh via sigmoid), side rows verbatim.
    whT = jnp.zeros((opad, feat_dim), jnp.float32)
    whT = whT.at[:c].set(2.0 * w_rec.T)
    whT = whT.at[c:c + NUM_SIDE].set(w_side.T)
    whT = whT.astype(jnp.bfloat16)
    bh = jnp.zeros((opad, 1), jnp.float32)
    bh = bh.at[:c, 0].set(2.0 * b_rec)
    bh = bh.at[c:c + NUM_SIDE, 0].set(b_side)
    scale = jnp.concatenate([jnp.full((c,), 2.0, jnp.float32),
                             jnp.ones((NUM_SIDE,), jnp.float32),
                             jnp.zeros((opad - c - NUM_SIDE,), jnp.float32)]
                            ).reshape(opad, 1)
    offset = jnp.concatenate([jnp.full((c,), -1.0, jnp.float32),
                              jnp.zeros((opad - c,), jnp.float32)]).reshape(opad, 1)

    # Static in-kernel row chunking: bounds the f32 temporaries (~0.7 KB/pixel).
    th = max(1, min(h, chunk_pixels // wp))
    chunks = tuple((h0, min(th, h - h0)) for h0 in range(0, h, th))
    kernel = make_fmd_kernel(chunks, wp)

    cost = pl.CostEstimate(
        flops=2 * n * l_out * (9 * cp * feat_dim + feat_dim * opad),
        transcendentals=n * l_out * opad,                 # single sigmoid sweep
        bytes_accessed=(x_flat.size * 4 + wfT.size * 2 + whT.size * 2
                        + (bf.size + bh.size + scale.size + offset.size) * 4
                        + n * opad * l_out * 4),
    )

    out = pl.pallas_call(
        kernel,
        out_shape=jax.ShapeDtypeStruct((n, opad, l_out), jnp.float32),
        grid_spec=pltpu.PrefetchScalarGridSpec(
            num_scalar_prefetch=0,
            grid=(n,),
            in_specs=[
                pl.BlockSpec((None, cp, l_pad), lambda i: (i, 0, 0)),     # image
                pl.BlockSpec((feat_dim, 9 * cp), lambda i: (0, 0)),       # wfT
                pl.BlockSpec((feat_dim, 1), lambda i: (0, 0)),            # b_feat
                pl.BlockSpec((opad, feat_dim), lambda i: (0, 0)),         # whT
                pl.BlockSpec((opad, 1), lambda i: (0, 0)),                # b_head
                pl.BlockSpec((opad, 1), lambda i: (0, 0)),                # scale
                pl.BlockSpec((opad, 1), lambda i: (0, 0)),                # offset
            ],
            out_specs=pl.BlockSpec((None, opad, l_out), lambda i: (i, 0, 0)),
        ),
        compiler_params=pltpu.CompilerParams(
            dimension_semantics=("parallel",),           # batch across TensorCores
            vmem_limit_bytes=32 * 1024 * 1024,
        ),
        cost_estimate=cost,
    )(x_flat, wfT, bf, whT, bh, scale, offset)

    # Output is already channel-major (NCHW-like): just drop the 2 halo columns / pad rows.
    out4 = out.reshape(n, opad, h, wp)[:, :, :, :w]
    rec_img = out4[:, :c]
    sides = out4[:, c:c + NUM_SIDE]
    d = [sides[:, i:i + 1] for i in range(NUM_SIDE)]
    return (rec_img, *d)


def fmd_reference(x_nchw, params):
    """Pure-JAX f32 reference of the same stand-in network (for validation)."""
    w_feat, b_feat, w_rec, b_rec, w_side, b_side = params
    n, c, h, w = x_nchw.shape
    f = w_feat.shape[-1]
    xp = jnp.pad(x_nchw, ((0, 0), (0, 0), (1, 1), (1, 1)))
    cols = []
    for dh in range(3):
        for dw in range(3):
            cols.append(jnp.transpose(xp[:, :, dh:dh + h, dw:dw + w], (0, 2, 3, 1)))
    patches = jnp.concatenate(cols, axis=-1)                       # [n,h,w,9c]
    feat = jnp.maximum(patches @ w_feat.reshape(9 * c, f) + b_feat, 0.0)
    rec = jnp.tanh(feat @ w_rec + b_rec)                           # [n,h,w,c]
    sides = jax.nn.sigmoid(feat @ w_side + b_side)                 # [n,h,w,6]
    rec = jnp.transpose(rec, (0, 3, 1, 2))
    sides = jnp.transpose(sides, (0, 3, 1, 2))
    return (rec, *[sides[:, i:i + 1] for i in range(NUM_SIDE)])


def init_params(key, in_channels, feat_dim):
    k1, k2, k3 = jax.random.split(key, 3)
    w_feat = 0.05 * jax.random.normal(k1, (3, 3, in_channels, feat_dim), jnp.float32)
    b_feat = jnp.zeros((feat_dim,), jnp.float32)
    w_rec = 0.05 * jax.random.normal(k2, (feat_dim, in_channels), jnp.float32)
    b_rec = jnp.zeros((in_channels,), jnp.float32)
    w_side = 0.05 * jax.random.normal(k3, (feat_dim, NUM_SIDE), jnp.float32)
    b_side = jnp.zeros((NUM_SIDE,), jnp.float32)
    return (w_feat, b_feat, w_rec, b_rec, w_side, b_side)


if __name__ == "__main__":
    key = jax.random.PRNGKey(0)
    kx, kp = jax.random.split(key)

    N, C, H, W = 2, 4, 16, 16          # small NCHW input, as in FMD.set_input
    FEAT = 32

    x = jax.random.normal(kx, (N, C, H, W), jnp.float32)
    params = init_params(kp, C, FEAT)

    outs = jax.jit(lambda a: fmd_forward(a, params))(x)
    outs = jax.block_until_ready(outs)

    rec_img, d0, d1, d2, d3, d4, d6 = outs
    assert rec_img.shape == (N, C, H, W)
    for d in (d0, d1, d2, d3, d4, d6):
        assert d.shape == (N, 1, H, W)
        assert bool(jnp.all((d >= 0.0) & (d <= 1.0)))

    # Validate against the f32 reference (bf16 matmul operands -> loose tolerance).
    refs = fmd_reference(x, params)
    for got, want in zip(outs, refs):
        err = float(jnp.max(jnp.abs(got - want)))
        assert err < 2e-2, f"max abs err {err}"

    print("KERNEL_OK")
</pallas_src>

<mosaic_0001>
module attributes {stable_mosaic.version = 11 : i64} {
  func.func @kernel(%arg0: i32, %arg1: memref<1x8x384xf32, #tpu.memory_space<vmem>>, %arg2: memref<32x72xbf16, #tpu.memory_space<vmem>>, %arg3: memref<32x1xf32, #tpu.memory_space<vmem>>, %arg4: memref<16x32xbf16, #tpu.memory_space<vmem>>, %arg5: memref<16x1xf32, #tpu.memory_space<vmem>>, %arg6: memref<16x1xf32, #tpu.memory_space<vmem>>, %arg7: memref<16x1xf32, #tpu.memory_space<vmem>>, %arg8: memref<1x16x288xf32, #tpu.memory_space<vmem>>) attributes {dimension_semantics = [#tpu.dimension_semantics<parallel>], iteration_bounds = array<i64: 2>, scalar_prefetch = 0 : i64, scratch_operands = 0 : i64, tpu.core_type = #tpu.core_type<tc>, window_params = [{transform_indices = @transform_0, window_bounds = array<i64: 1, 8, 384>}, {pipeline_mode = #tpu.pipeline_mode<synchronous>, transform_indices = @transform_1, window_bounds = array<i64: 32, 72>}, {pipeline_mode = #tpu.pipeline_mode<synchronous>, transform_indices = @transform_2, window_bounds = array<i64: 32, 1>}, {pipeline_mode = #tpu.pipeline_mode<synchronous>, transform_indices = @transform_3, window_bounds = array<i64: 16, 32>}, {pipeline_mode = #tpu.pipeline_mode<synchronous>, transform_indices = @transform_4, window_bounds = array<i64: 16, 1>}, {pipeline_mode = #tpu.pipeline_mode<synchronous>, transform_indices = @transform_5, window_bounds = array<i64: 16, 1>}, {pipeline_mode = #tpu.pipeline_mode<synchronous>, transform_indices = @transform_6, window_bounds = array<i64: 16, 1>}, {transform_indices = @transform_7, window_bounds = array<i64: 1, 16, 288>}]} {
    %c0 = arith.constant 0 : index
    %c0_0 = arith.constant 0 : index
    %0 = vector.load %arg2[%c0, %c0_0] : memref<32x72xbf16, #tpu.memory_space<vmem>>, vector<32x72xbf16>
    %c0_1 = arith.constant 0 : index
    %c0_2 = arith.constant 0 : index
    %1 = vector.load %arg4[%c0_1, %c0_2] : memref<16x32xbf16, #tpu.memory_space<vmem>>, vector<16x32xbf16>
    %c0_3 = arith.constant 0 : index
    %c0_4 = arith.constant 0 : index
    %2 = vector.load %arg3[%c0_3, %c0_4] : memref<32x1xf32, #tpu.memory_space<vmem>>, vector<32x1xf32>
    %c0_5 = arith.constant 0 : index
    %c0_6 = arith.constant 0 : index
    %3 = vector.load %arg5[%c0_5, %c0_6] : memref<16x1xf32, #tpu.memory_space<vmem>>, vector<16x1xf32>
    %c0_7 = arith.constant 0 : index
    %c0_8 = arith.constant 0 : index
    %4 = vector.load %arg6[%c0_7, %c0_8] : memref<16x1xf32, #tpu.memory_space<vmem>>, vector<16x1xf32>
    %c0_9 = arith.constant 0 : index
    %c0_10 = arith.constant 0 : index
    %5 = vector.load %arg7[%c0_9, %c0_10] : memref<16x1xf32, #tpu.memory_space<vmem>>, vector<16x1xf32>
    %c0_11 = arith.constant 0 : index
    %c0_12 = arith.constant 0 : index
    %c0_13 = arith.constant 0 : index
    %6 = vector.load %arg1[%c0_11, %c0_12, %c0_13] : memref<1x8x384xf32, #tpu.memory_space<vmem>>, vector<1x8x288xf32>
    %7 = vector.shape_cast %6 : vector<1x8x288xf32> to vector<8x288xf32>
    %c0_14 = arith.constant 0 : index
    %c0_15 = arith.constant 0 : index
    %c1 = arith.constant 1 : index
    %8 = vector.load %arg1[%c0_14, %c0_15, %c1] : memref<1x8x384xf32, #tpu.memory_space<vmem>>, vector<1x8x288xf32>
    %9 = vector.shape_cast %8 : vector<1x8x288xf32> to vector<8x288xf32>
    %c0_16 = arith.constant 0 : index
    %c0_17 = arith.constant 0 : index
    %c2 = arith.constant 2 : index
    %10 = vector.load %arg1[%c0_16, %c0_17, %c2] : memref<1x8x384xf32, #tpu.memory_space<vmem>>, vector<1x8x288xf32>
    %11 = vector.shape_cast %10 : vector<1x8x288xf32> to vector<8x288xf32>
    %c0_18 = arith.constant 0 : index
    %c0_19 = arith.constant 0 : index
    %c18 = arith.constant 18 : index
    %12 = vector.load %arg1[%c0_18, %c0_19, %c18] : memref<1x8x384xf32, #tpu.memory_space<vmem>>, vector<1x8x288xf32>
    %13 = vector.shape_cast %12 : vector<1x8x288xf32> to vector<8x288xf32>
    %c0_20 = arith.constant 0 : index
    %c0_21 = arith.constant 0 : index
    %c19 = arith.constant 19 : index
    %14 = vector.load %arg1[%c0_20, %c0_21, %c19] : memref<1x8x384xf32, #tpu.memory_space<vmem>>, vector<1x8x288xf32>
    %15 = vector.shape_cast %14 : vector<1x8x288xf32> to vector<8x288xf32>
    %c0_22 = arith.constant 0 : index
    %c0_23 = arith.constant 0 : index
    %c20 = arith.constant 20 : index
    %16 = vector.load %arg1[%c0_22, %c0_23, %c20] : memref<1x8x384xf32, #tpu.memory_space<vmem>>, vector<1x8x288xf32>
    %17 = vector.shape_cast %16 : vector<1x8x288xf32> to vector<8x288xf32>
    %c0_24 = arith.constant 0 : index
    %c0_25 = arith.constant 0 : index
    %c36 = arith.constant 36 : index
    %18 = vector.load %arg1[%c0_24, %c0_25, %c36] : memref<1x8x384xf32, #tpu.memory_space<vmem>>, vector<1x8x288xf32>
    %19 = vector.shape_cast %18 : vector<1x8x288xf32> to vector<8x288xf32>
    %c0_26 = arith.constant 0 : index
    %c0_27 = arith.constant 0 : index
    %c37 = arith.constant 37 : index
    %20 = vector.load %arg1[%c0_26, %c0_27, %c37] : memref<1x8x384xf32, #tpu.memory_space<vmem>>, vector<1x8x288xf32>
    %21 = vector.shape_cast %20 : vector<1x8x288xf32> to vector<8x288xf32>
    %c0_28 = arith.constant 0 : index
    %c0_29 = arith.constant 0 : index
    %c38 = arith.constant 38 : index
    %22 = vector.load %arg1[%c0_28, %c0_29, %c38] : memref<1x8x384xf32, #tpu.memory_space<vmem>>, vector<1x8x288xf32>
    %23 = vector.shape_cast %22 : vector<1x8x288xf32> to vector<8x288xf32>
    %24 = tpu.concatenate %7, %9, %11, %13, %15, %17, %19, %21, %23 in 0 : vector<8x288xf32>, vector<8x288xf32>, vector<8x288xf32>, vector<8x288xf32>, vector<8x288xf32>, vector<8x288xf32>, vector<8x288xf32>, vector<8x288xf32>, vector<8x288xf32> -> vector<72x288xf32>
    %25 = arith.truncf %24 : vector<72x288xf32> to vector<72x288xbf16>
    %cst = arith.constant dense<0.000000e+00> : vector<32x288xf32>
    %26 = tpu.matmul %0, %25, %cst {dimension_numbers = #tpu.dot_dimension_numbers<[1], [0], [0], [1], [0, 0, 1, 1], [], []>} : vector<32x72xbf16>, vector<72x288xbf16>, vector<32x288xf32> -> vector<32x288xf32>
    %27 = vector.broadcast %2 : vector<32x1xf32> to vector<32x288xf32>
    %28 = arith.addf %26, %27 : vector<32x288xf32>
    %cst_30 = arith.constant 0.000000e+00 : f32
    %29 = vector.broadcast %cst_30 : f32 to vector<32x288xf32>
    %30 = arith.maximumf %28, %29 : vector<32x288xf32>
    %31 = arith.truncf %30 : vector<32x288xf32> to vector<32x288xbf16>
    %cst_31 = arith.constant dense<0.000000e+00> : vector<16x288xf32>
    %32 = tpu.matmul %1, %31, %cst_31 {dimension_numbers = #tpu.dot_dimension_numbers<[1], [0], [0], [1], [0, 0, 1, 1], [], []>} : vector<16x32xbf16>, vector<32x288xbf16>, vector<16x288xf32> -> vector<16x288xf32>
    %33 = vector.broadcast %3 : vector<16x1xf32> to vector<16x288xf32>
    %34 = arith.addf %32, %33 : vector<16x288xf32>
    %35 = arith.negf %34 : vector<16x288xf32>
    %36 = math.exp %35 : vector<16x288xf32>
    %cst_32 = arith.constant 1.000000e+00 : f32
    %37 = vector.broadcast %cst_32 : f32 to vector<16x288xf32>
    %38 = arith.addf %37, %36 : vector<16x288xf32>
    %39 = arith.divf %37, %38 : vector<16x288xf32>
    %40 = vector.broadcast %4 : vector<16x1xf32> to vector<16x288xf32>
    %41 = arith.mulf %40, %39 : vector<16x288xf32>
    %42 = vector.broadcast %5 : vector<16x1xf32> to vector<16x288xf32>
    %43 = arith.addf %41, %42 : vector<16x288xf32>
    %c0_33 = arith.constant 0 : index
    %c0_34 = arith.constant 0 : index
    %c0_35 = arith.constant 0 : index
    %44 = vector.load %arg8[%c0_33, %c0_34, %c0_35] : memref<1x16x288xf32, #tpu.memory_space<vmem>>, vector<1x16x288xf32>
    %45 = vector.shape_cast %44 : vector<1x16x288xf32> to vector<16x288xf32>
    %46 = vector.shape_cast %43 : vector<16x288xf32> to vector<1x16x288xf32>
    tpu.vector_store %arg8[%c0_33, %c0_34, %c0_35], %46 {strides = array<i32>} : memref<1x16x288xf32, #tpu.memory_space<vmem>>, vector<1x16x288xf32>,
    return
  }
  func.func @transform_0(%arg0: i32) -> (i32, i32, i32) {
    %c0_i32 = arith.constant 0 : i32
    %c0_i32_0 = arith.constant 0 : i32
    %c0_i32_1 = arith.constant 0 : i32
    return %arg0, %c0_i32, %c0_i32_0 : i32, i32, i32
  }
  func.func @transform_1(%arg0: i32) -> (i32, i32) {
    %c0_i32 = arith.constant 0 : i32
    %c0_i32_0 = arith.constant 0 : i32
    %c0_i32_1 = arith.constant 0 : i32
    return %c0_i32, %c0_i32_0 : i32, i32
  }
  func.func @transform_2(%arg0: i32) -> (i32, i32) {
    %c0_i32 = arith.constant 0 : i32
    %c0_i32_0 = arith.constant 0 : i32
    %c0_i32_1 = arith.constant 0 : i32
    return %c0_i32, %c0_i32_0 : i32, i32
  }
  func.func @transform_3(%arg0: i32) -> (i32, i32) {
    %c0_i32 = arith.constant 0 : i32
    %c0_i32_0 = arith.constant 0 : i32
    %c0_i32_1 = arith.constant 0 : i32
    return %c0_i32, %c0_i32_0 : i32, i32
  }
  func.func @transform_4(%arg0: i32) -> (i32, i32) {
    %c0_i32 = arith.constant 0 : i32
    %c0_i32_0 = arith.constant 0 : i32
    %c0_i32_1 = arith.constant 0 : i32
    return %c0_i32, %c0_i32_0 : i32, i32
  }
  func.func @transform_5(%arg0: i32) -> (i32, i32) {
    %c0_i32 = arith.constant 0 : i32
    %c0_i32_0 = arith.constant 0 : i32
    %c0_i32_1 = arith.constant 0 : i32
    return %c0_i32, %c0_i32_0 : i32, i32
  }
  func.func @transform_6(%arg0: i32) -> (i32, i32) {
    %c0_i32 = arith.constant 0 : i32
    %c0_i32_0 = arith.constant 0 : i32
    %c0_i32_1 = arith.constant 0 : i32
    return %c0_i32, %c0_i32_0 : i32, i32
  }
  func.func @transform_7(%arg0: i32) -> (i32, i32, i32) {
    %c0_i32 = arith.constant 0 : i32
    %c0_i32_0 = arith.constant 0 : i32
    %c0_i32_1 = arith.constant 0 : i32
    return %arg0, %c0_i32, %c0_i32_0 : i32, i32, i32
  }
}

</mosaic_0001>

<llo_original>
// kernel: _lambda_.1
$region0: #{_lambda_.1}
  #allocation0 [shape = 'u32[]', space=smem, size = 0x4, offset = 0x4, fixed_abs, tag = 'smem constant byte address 0x4 - core index']
  #allocation1 [shape = 'u32[144,128]{1,0:T(1,128)}', space=vmem, size = 0x12000, scoped, tag = 'internal scratch']
  %s0 = inlined_call_operand.vmem [shape: f32[2,8,384], index: 0, kind: input, shape index: {}]
  %s1 = inlined_call_operand.vmem [shape: bf16[32,72], index: 1, kind: input, shape index: {}]
  %s2 = inlined_call_operand.vmem [shape: f32[32,1], index: 2, kind: input, shape index: {}]
  %s3 = inlined_call_operand.vmem [shape: bf16[16,32], index: 3, kind: input, shape index: {}]
  %s4 = inlined_call_operand.vmem [shape: f32[16,1], index: 4, kind: input, shape index: {}]
  %s5 = inlined_call_operand.vmem [shape: f32[16,1], index: 5, kind: input, shape index: {}]
  %s6 = inlined_call_operand.vmem [shape: f32[16,1], index: 6, kind: input, shape index: {}]
  %s7 = inlined_call_operand.vmem [shape: f32[2,16,288], index: 7, kind: output, shape index: {}]
  %s8 = sld [smem:[#allocation0]]
  $region61: #{_lambda_.1} parent=0
    _
  %s10 = ssub.s32 1, %s8
  %s11 = scalar_select 0, %s10, %s8
  loop: start=0, step=1, limit=4
  $region2: #{_lambda_.1} parent=0 // loop_pre_header
    _
  $region3: #{_lambda_.1} parent=0 // loop_header
    %s13 = sphi 0, %s17
    %p14 = scmp.ge.s32.totalorder %s13, 4
    %s23 = sphi 0, %s25
    %s26 = sphi 0, %s23
    %s27 = sphi 0, %s26
    %s43 = sphi 0, %s27
    %s47 = sphi 0, %s47
    %s49 = sphi 0, %s47
    %s50 = sphi 0, %s49
    %s64 = sphi 0, %s50
    %s68 = sphi 0, %s68
    %s70 = sphi 0, %s68
    %s71 = sphi 0, %s70
    %s85 = sphi 0, %s71
    %s89 = sphi 0, %s89
    %s91 = sphi 0, %s89
    %s92 = sphi 0, %s91
    %s106 = sphi 0, %s92
    %s110 = sphi 0, %s110
    %s112 = sphi 0, %s110
    %s113 = sphi 0, %s112
    %s127 = sphi 0, %s113
    %s131 = sphi 0, %s131
    %s133 = sphi 0, %s131
    %s134 = sphi 0, %s133
    %s148 = sphi 0, %s134
    %s152 = sphi 0, %s152
    %s154 = sphi 0, %s152
    %s155 = sphi 0, %s154
    %s169 = sphi 0, %s155
    %s175 = sphi 0, %s177
    %s178 = sphi 0, %s175
    %s179 = sphi 0, %s178
    %s195 = sphi 0, %s179
  $region4: #{_lambda_.1} parent=0 // loop_header_branch
    %16 = sbr.rel (%p14) target = $region8
  $region5: #{_lambda_.1} parent=0 // loop_body
    %s18 = ssub.s32 %s13, 1
    %s19 = ssub.s32 %s13, 2
    %s20 = sadd.s32 %s13, 1
    %s21 = ssub.s32 %s13, %s20
    %p22 = scmp.eq.s32.totalorder %s21, 0
    %s24 = sadd.s32 %s23, 1
    %s25 = scalar_select %p22, %s23, %s24
    %p28 = pneg %p22
    %p29 = scmp.eq.s32.totalorder %s13, 1
    %p30 = por %p28, %p29
    %p31 = scmp.ne.s32.totalorder %s23, %s26
    %p32 = scmp.eq.s32.totalorder %s13, 0
    %p33 = por %p31, %p32
    %p34 = scmp.ne.s32.totalorder %s23, %s26
    %p35 = scmp.eq.s32.totalorder %s18, 1
    %p36 = por %p34, %p35
    %p37 = scmp.ne.s32.totalorder %s26, %s27
    %p38 = scmp.eq.s32.totalorder %s18, 0
    %p39 = por %p37, %p38
    %p40 = scmp.ne.s32.totalorder %s26, %s27
    %p41 = scmp.eq.s32.totalorder %s19, 1
    %p42 = por %p40, %p41
    %p44 = scmp.ne.s32.totalorder %s27, %s43
    %p45 = scmp.eq.s32.totalorder %s19, 0
    %p46 = por %p44, %p45
    %s48 = sadd.s32 %s47, 1
    %p51 = scmp.eq.s32.totalorder %s13, 1
    %p52 = scmp.ne.s32.totalorder %s47, %s49
    %p53 = scmp.eq.s32.totalorder %s13, 0
    %p54 = por %p52, %p53
    %p55 = scmp.ne.s32.totalorder %s47, %s49
    %p56 = scmp.eq.s32.totalorder %s18, 1
    %p57 = por %p55, %p56
    %p58 = scmp.ne.s32.totalorder %s49, %s50
    %p59 = scmp.eq.s32.totalorder %s18, 0
    %p60 = por %p58, %p59
    %p61 = scmp.ne.s32.totalorder %s49, %s50
    %p62 = scmp.eq.s32.totalorder %s19, 1
    %p63 = por %p61, %p62
    %p65 = scmp.ne.s32.totalorder %s50, %s64
    %p66 = scmp.eq.s32.totalorder %s19, 0
    %p67 = por %p65, %p66
    %s69 = sadd.s32 %s68, 1
    %p72 = scmp.eq.s32.totalorder %s13, 1
    %p73 = scmp.ne.s32.totalorder %s68, %s70
    %p74 = scmp.eq.s32.totalorder %s13, 0
    %p75 = por %p73, %p74
    %p76 = scmp.ne.s32.totalorder %s68, %s70
    %p77 = scmp.eq.s32.totalorder %s18, 1
    %p78 = por %p76, %p77
    %p79 = scmp.ne.s32.totalorder %s70, %s71
    %p80 = scmp.eq.s32.totalorder %s18, 0
    %p81 = por %p79, %p80
    %p82 = scmp.ne.s32.totalorder %s70, %s71
    %p83 = scmp.eq.s32.totalorder %s19, 1
    %p84 = por %p82, %p83
    %p86 = scmp.ne.s32.totalorder %s71, %s85
    %p87 = scmp.eq.s32.totalorder %s19, 0
    %p88 = por %p86, %p87
    %s90 = sadd.s32 %s89, 1
    %p93 = scmp.eq.s32.totalorder %s13, 1
    %p94 = scmp.ne.s32.totalorder %s89, %s91
    %p95 = scmp.eq.s32.totalorder %s13, 0
    %p96 = por %p94, %p95
    %p97 = scmp.ne.s32.totalorder %s89, %s91
    %p98 = scmp.eq.s32.totalorder %s18, 1
    %p99 = por %p97, %p98
    %p100 = scmp.ne.s32.totalorder %s91, %s92
    %p101 = scmp.eq.s32.totalorder %s18, 0
    %p102 = por %p100, %p101
    %p103 = scmp.ne.s32.totalorder %s91, %s92
    %p104 = scmp.eq.s32.totalorder %s19, 1
    %p105 = por %p103, %p104
    %p107 = scmp.ne.s32.totalorder %s92, %s106
    %p108 = scmp.eq.s32.totalorder %s19, 0
    %p109 = por %p107, %p108
    %s111 = sadd.s32 %s110, 1
    %p114 = scmp.eq.s32.totalorder %s13, 1
    %p115 = scmp.ne.s32.totalorder %s110, %s112
    %p116 = scmp.eq.s32.totalorder %s13, 0
    %p117 = por %p115, %p116
    %p118 = scmp.ne.s32.totalorder %s110, %s112
    %p119 = scmp.eq.s32.totalorder %s18, 1
    %p120 = por %p118, %p119
    %p121 = scmp.ne.s32.totalorder %s112, %s113
    %p122 = scmp.eq.s32.totalorder %s18, 0
    %p123 = por %p121, %p122
    %p124 = scmp.ne.s32.totalorder %s112, %s113
    %p125 = scmp.eq.s32.totalorder %s19, 1
    %p126 = por %p124, %p125
    %p128 = scmp.ne.s32.totalorder %s113, %s127
    %p129 = scmp.eq.s32.totalorder %s19, 0
    %p130 = por %p128, %p129
    %s132 = sadd.s32 %s131, 1
    %p135 = scmp.eq.s32.totalorder %s13, 1
    %p136 = scmp.ne.s32.totalorder %s131, %s133
    %p137 = scmp.eq.s32.totalorder %s13, 0
    %p138 = por %p136, %p137
    %p139 = scmp.ne.s32.totalorder %s131, %s133
    %p140 = scmp.eq.s32.totalorder %s18, 1
    %p141 = por %p139, %p140
    %p142 = scmp.ne.s32.totalorder %s133, %s134
    %p143 = scmp.eq.s32.totalorder %s18, 0
    %p144 = por %p142, %p143
    %p145 = scmp.ne.s32.totalorder %s133, %s134
    %p146 = scmp.eq.s32.totalorder %s19, 1
    %p147 = por %p145, %p146
    %p149 = scmp.ne.s32.totalorder %s134, %s148
    %p150 = scmp.eq.s32.totalorder %s19, 0
    %p151 = por %p149, %p150
    %s153 = sadd.s32 %s152, 1
    %p156 = scmp.eq.s32.totalorder %s13, 1
    %p157 = scmp.ne.s32.totalorder %s152, %s154
    %p158 = scmp.eq.s32.totalorder %s13, 0
    %p159 = por %p157, %p158
    %p160 = scmp.ne.s32.totalorder %s152, %s154
    %p161 = scmp.eq.s32.totalorder %s18, 1
    %p162 = por %p160, %p161
    %p163 = scmp.ne.s32.totalorder %s154, %s155
    %p164 = scmp.eq.s32.totalorder %s18, 0
    %p165 = por %p163, %p164
    %p166 = scmp.ne.s32.totalorder %s154, %s155
    %p167 = scmp.eq.s32.totalorder %s19, 1
    %p168 = por %p166, %p167
    %p170 = scmp.ne.s32.totalorder %s155, %s169
    %p171 = scmp.eq.s32.totalorder %s19, 0
    %p172 = por %p170, %p171
    %s173 = ssub.s32 %s13, %s20
    %p174 = scmp.eq.s32.totalorder %s173, 0
    %s176 = sadd.s32 %s175, 1
    %s177 = scalar_select %p174, %s175, %s176
    %p180 = pneg %p174
    %p181 = scmp.eq.s32.totalorder %s13, 1
    %p182 = por %p180, %p181
    %p183 = scmp.ne.s32.totalorder %s175, %s178
    %p184 = scmp.eq.s32.totalorder %s13, 0
    %p185 = por %p183, %p184
    %p186 = scmp.ne.s32.totalorder %s175, %s178
    %p187 = scmp.eq.s32.totalorder %s18, 1
    %p188 = por %p186, %p187
    %p189 = scmp.ne.s32.totalorder %s178, %s179
    %p190 = scmp.eq.s32.totalorder %s18, 0
    %p191 = por %p189, %p190
    %p192 = scmp.ne.s32.totalorder %s178, %s179
    %p193 = scmp.eq.s32.totalorder %s19, 1
    %p194 = por %p192, %p193
    %p196 = scmp.ne.s32.totalorder %s179, %s195
    %p197 = scmp.eq.s32.totalorder %s19, 0
    %p198 = por %p196, %p197
    %p199 = scmp.le.s32.totalorder 1, %s13
    %p200 = scmp.lt.s32.totalorder %s13, 3
    %p201 = pnand %p199, %p200
    %p202 = pneg %p201
    // Predicated region
    $region9: #{_lambda_.1} parent=5 // pred_check
      _
    $region10: #{_lambda_.1} parent=5 // pred_check_branch
      %204 = sbr.rel (%p201) target = $region12
    $region11: #{_lambda_.1} parent=5 // pred_region
      %s205 = ssub.s32 %s13, 1
      // Predicated region
      $region13: #{_lambda_.1} parent=11 // pred_check
        %p206 = pneg %p60
      $region14: #{_lambda_.1} parent=11 // pred_check_branch
        %208 = sbr.rel (%p206) target = $region16
      $region15: #{_lambda_.1} parent=11 // pred_region
        _
      $region16: #{_lambda_.1} parent=11 // pred_fallthru
        _
      // Predicated region
      $region17: #{_lambda_.1} parent=11 // pred_check
        %p209 = pneg %p81
      $region18: #{_lambda_.1} parent=11 // pred_check_branch
        %211 = sbr.rel (%p209) target = $region20
      $region19: #{_lambda_.1} parent=11 // pred_region
        _
      $region20: #{_lambda_.1} parent=11 // pred_fallthru
        _
      // Predicated region
      $region21: #{_lambda_.1} parent=11 // pred_check
        %p212 = pneg %p102
      $region22: #{_lambda_.1} parent=11 // pred_check_branch
        %214 = sbr.rel (%p212) target = $region24
      $region23: #{_lambda_.1} parent=11 // pred_region
        _
      $region24: #{_lambda_.1} parent=11 // pred_fallthru
        _
      // Predicated region
      $region25: #{_lambda_.1} parent=11 // pred_check
        %p215 = pneg %p123
      $region26: #{_lambda_.1} parent=11 // pred_check_branch
        %217 = sbr.rel (%p215) target = $region28
      $region27: #{_lambda_.1} parent=11 // pred_region
        _
      $region28: #{_lambda_.1} parent=11 // pred_fallthru
        _
      // Predicated region
      $region29: #{_lambda_.1} parent=11 // pred_check
        %p218 = pneg %p144
      $region30: #{_lambda_.1} parent=11 // pred_check_branch
        %220 = sbr.rel (%p218) target = $region32
      $region31: #{_lambda_.1} parent=11 // pred_region
        _
      $region32: #{_lambda_.1} parent=11 // pred_fallthru
        _
      // Predicated region
      $region33: #{_lambda_.1} parent=11 // pred_check
        %p221 = pneg %p165
      $region34: #{_lambda_.1} parent=11 // pred_check_branch
        %223 = sbr.rel (%p221) target = $region36
      $region35: #{_lambda_.1} parent=11 // pred_region
        _
      $region36: #{_lambda_.1} parent=11 // pred_fallthru
        _
    $region12: #{_lambda_.1} parent=5 // pred_fallthru
      _
    %p224 = scmp.lt.s32.totalorder %s13, 2
    // Predicated region
    $region37: #{_lambda_.1} parent=5 // pred_check
      %p225 = pneg %p224
    $region38: #{_lambda_.1} parent=5 // pred_check_branch
      %227 = sbr.rel (%p225) target = $region40
    $region39: #{_lambda_.1} parent=5 // pred_region
      // Predicated region
      $region41: #{_lambda_.1} parent=39 // pred_check
        %p228 = pneg %p33
      $region42: #{_lambda_.1} parent=39 // pred_check_branch
        %230 = sbr.rel (%p228) target = $region44
      $region43: #{_lambda_.1} parent=39 // pred_region
        %p231 = scmp.lt.s32.totalorder %s13, 1
        %s232 = scalar_select %p231, %s13, 1
        %s233 = smul.addr %s232, 3
        %s234 = smul.addr %s233, 8
        %s235 = scalar_lea.vmem %s0, %s234
      $region44: #{_lambda_.1} parent=39 // pred_fallthru
        _
    $region40: #{_lambda_.1} parent=5 // pred_fallthru
      _
    %p236 = scmp.le.s32.totalorder 1, %s13
    %p237 = scmp.lt.s32.totalorder %s13, 3
    %p238 = pnand %p236, %p237
    %p239 = pneg %p238
    // Predicated region
    $region45: #{_lambda_.1} parent=5 // pred_check
      _
    $region46: #{_lambda_.1} parent=5 // pred_check_branch
      %241 = sbr.rel (%p238) target = $region48
    $region47: #{_lambda_.1} parent=5 // pred_region
      %s242 = ssub.s32 %s13, 1
      %p243 = scmp.lt.s32.totalorder %s18, 1
      %s244 = scalar_select %p243, %s18, 1
      %s245 = smul.addr %s244, 3
      %s246 = smul.addr %s245, 8
      %s247 = scalar_lea.vmem %s0, %s246
      %p248 = pneg %p39
      %p249 = pneg %p36
      %p250 = pneg %p60
      %p251 = pneg %p57
      %p252 = pneg %p81
      %p253 = pneg %p78
      %p254 = pneg %p102
      %p255 = pneg %p99
      %p256 = pneg %p123
      %p257 = pneg %p120
      %p258 = pneg %p144
      %p259 = pneg %p141
      %p260 = pneg %p165
      %p261 = pneg %p162
      %p262 = pneg %p191
      %p263 = pneg %p188
      %p264 = scmp.lt.s32.totalorder %s18, 1
      %s265 = scalar_select %p264, %s18, 1
      %s266 = smul.addr %s265, 6
      %s267 = smul.addr %s266, 8
      %s268 = scalar_lea.vmem %s7, %s267
      %p269 = scmp.lt.s32.totalorder %s18, 1
      %s270 = scalar_select %p269, %s18, 1
      %s271 = smul.addr %s270, 3
      %s272 = smul.addr %s271, 8
      %s273 = scalar_lea.vmem %s0, %s272
      %p274 = scmp.lt.s32.totalorder %s18, 1
      %s275 = scalar_select %p274, %s18, 1
      %s276 = smul.addr %s275, 6
      %s277 = smul.addr %s276, 8
      %s278 = scalar_lea.vmem %s7, %s277
      %v280 = vld [vmem:[%s1] sm:$0xf]
      %v281 = vld [vmem:[%s1 + $0x4] sm:$0xf]
      %v282 = vld [vmem:[%s1 + $0x8] sm:$0xf]
      %v283 = vld [vmem:[%s1 + $0xc] sm:$0xf]
      %v284 = vld [vmem:[%s3] sm:$0xf]
      %v285 = vld [vmem:[%s3 + $0x4] sm:$0xf]
      %v286 = vld [vmem:[%s2] sm:$0xff]
      %v287 = vld [vmem:[%s2 + $0x8] sm:$0xff]
      %v288 = vld [vmem:[%s2 + $0x10] sm:$0xff]
      %v289 = vld [vmem:[%s2 + $0x18] sm:$0xff]
      %v290 = vld [vmem:[%s4] sm:$0xff]
      %v291 = vld [vmem:[%s4 + $0x8] sm:$0xff]
      %v292 = vld [vmem:[%s5] sm:$0xff]
      %v293 = vld [vmem:[%s5 + $0x8] sm:$0xff]
      %v294 = vld [vmem:[%s6] sm:$0xff]
      %v295 = vld [vmem:[%s6 + $0x8] sm:$0xff]
      %v296 = vld [vmem:[%s273] sm:$0xff]
      %v297 = vld [vmem:[%s273 + $0x8] sm:$0xff]
      %v298 = vld [vmem:[%s273 + $0x10] sm:$0xff]
      %302 = vrot.lane.b32.xlu0 %v296, 127
      %v303 = vpop.permute.xlu0 %302
      %304 = vrot.lane.b32.xlu0 %v297, 127
      %v305 = vpop.permute.xlu0 %304
      %306 = vrot.lane.b32.xlu0 %v298, 127
      %v307 = vpop.permute.xlu0 %306
      %vm308 = vcmask 1039360
      %v309 = vsel %vm308, %v303, %v305
      %v310 = vsel %vm308, %v305, %v307
      %314 = vrot.lane.b32.xlu0 %v296, 126
      %v315 = vpop.permute.xlu0 %314
      %316 = vrot.lane.b32.xlu0 %v297, 126
      %v317 = vpop.permute.xlu0 %316
      %318 = vrot.lane.b32.xlu0 %v298, 126
      %v319 = vpop.permute.xlu0 %318
      %vm320 = vcmask 1031168
      %v321 = vsel %vm320, %v315, %v317
      %v322 = vsel %vm320, %v317, %v319
      %326 = vrot.lane.b32.xlu0 %v296, 110
      %v327 = vpop.permute.xlu0 %326
      %328 = vrot.lane.b32.xlu0 %v297, 110
      %v329 = vpop.permute.xlu0 %328
      %330 = vrot.lane.b32.xlu0 %v298, 110
      %v331 = vpop.permute.xlu0 %330
      %vm332 = vcmask 900096
      %v333 = vsel %vm332, %v327, %v329
      %v334 = vsel %vm332, %v329, %v331
      %338 = vrot.lane.b32.xlu0 %v296, 109
      %v339 = vpop.permute.xlu0 %338
      %340 = vrot.lane.b32.xlu0 %v297, 109
      %v341 = vpop.permute.xlu0 %340
      %342 = vrot.lane.b32.xlu0 %v298, 109
      %v343 = vpop.permute.xlu0 %342
      %vm344 = vcmask 891904
      %v345 = vsel %vm344, %v339, %v341
      %v346 = vsel %vm344, %v341, %v343
      %350 = vrot.lane.b32.xlu0 %v296, 108
      %v351 = vpop.permute.xlu0 %350
      %352 = vrot.lane.b32.xlu0 %v297, 108
      %v353 = vpop.permute.xlu0 %352
      %354 = vrot.lane.b32.xlu0 %v298, 108
      %v355 = vpop.permute.xlu0 %354
      %vm356 = vcmask 883712
      %v357 = vsel %vm356, %v351, %v353
      %v358 = vsel %vm356, %v353, %v355
      %362 = vrot.lane.b32.xlu0 %v296, 92
      %v363 = vpop.permute.xlu0 %362
      %364 = vrot.lane.b32.xlu0 %v297, 92
      %v365 = vpop.permute.xlu0 %364
      %366 = vrot.lane.b32.xlu0 %v298, 92
      %v367 = vpop.permute.xlu0 %366
      %vm368 = vcmask 752640
      %v369 = vsel %vm368, %v363, %v365
      %v370 = vsel %vm368, %v365, %v367
      %374 = vrot.lane.b32.xlu0 %v296, 91
      %v375 = vpop.permute.xlu0 %374
      %376 = vrot.lane.b32.xlu0 %v297, 91
      %v377 = vpop.permute.xlu0 %376
      %378 = vrot.lane.b32.xlu0 %v298, 91
      %v379 = vpop.permute.xlu0 %378
      %vm380 = vcmask 744448
      %v381 = vsel %vm380, %v375, %v377
      %v382 = vsel %vm380, %v377, %v379
      %386 = vrot.lane.b32.xlu0 %v296, 90
      %v387 = vpop.permute.xlu0 %386
      %388 = vrot.lane.b32.xlu0 %v297, 90
      %v389 = vpop.permute.xlu0 %388
      %390 = vrot.lane.b32.xlu0 %v298, 90
      %v391 = vpop.permute.xlu0 %390
      %vm392 = vcmask 736256
      %v393 = vsel %vm392, %v387, %v389
      %v394 = vsel %vm392, %v389, %v391
      %v398 = vpack.c.bf16 %v309, %v296
      %v399 = vpack.c.bf16 %v310, %v297
      %v400 = vpack.c.bf16 %v307, %v298
      %v401 = vpack.c.bf16 %v333, %v321
      %v402 = vpack.c.bf16 %v334, %v322
      %v403 = vpack.c.bf16 %v331, %v319
      %v404 = vpack.c.bf16 %v357, %v345
      %v405 = vpack.c.bf16 %v358, %v346
      %v406 = vpack.c.bf16 %v355, %v343
      %v407 = vpack.c.bf16 %v381, %v369
      %v408 = vpack.c.bf16 %v382, %v370
      %v409 = vpack.c.bf16 %v379, %v367
      %v410 = vpack.c.bf16 %v393, %v393
      %v411 = vpack.c.bf16 %v394, %v394
      %v412 = vpack.c.bf16 %v391, %v391
      %414 = vset.pattern.permute.xlu0 0
      %415 = vperm.xlu0 %414, %v286
      %v416 = vpop.permute.xlu0 %415
      %419 = vset.pattern.permute.xlu0 0
      %420 = vperm.xlu0 %419, %v287
      %v421 = vpop.permute.xlu0 %420
      %424 = vset.pattern.permute.xlu0 0
      %425 = vperm.xlu0 %424, %v288
      %v426 = vpop.permute.xlu0 %425
      %429 = vset.pattern.permute.xlu0 0
      %430 = vperm.xlu0 %429, %v289
      %v431 = vpop.permute.xlu0 %430
      %v437 = vunpack.c.l.b16 %v280
      %v438 = vunpack.c.l.b16 %v281
      %v439 = vunpack.c.l.b16 %v282
      %v440 = vunpack.c.l.b16 %v283
      %v441 = vpack.c.b16 %v438, %v437
      %v442 = vpack.c.b16 %v440, %v439
      %vm443 = vcmask 588800
      %v445 = vsel %vm443, %v441, 0
      %v448 = vsel %vm443, %v442, 0
      %vm450 = vcmask 1043456
      %v452 = vsel %vm450, %v410, 0
      %v455 = vsel %vm450, %v411, 0
      %v458 = vsel %vm450, %v412, 0
      %460 = vmatprep.subr.bf16.mxu0 0
      %461 = vmatpush1.bf16.msra.mxu0 0
      %462 = vmatprep.subr.bf16.mxu0 0
      %463 = vmatpush1.bf16.msra.mxu0 0
      %464 = vmatprep.subr.bf16.mxu0 0
      %465 = vmatpush1.bf16.msra.mxu0 0
      %466 = vmatprep.subr.bf16.mxu0 %v455
      %467 = vmatpush1.bf16.msra.mxu0 %v452
      %468 = vmatprep.subr.bf16.mxu0 %v408
      %469 = vmatpush1.bf16.msra.mxu0 %v407
      %470 = vmatprep.subr.bf16.mxu0 %v405
      %471 = vmatpush1.bf16.msra.mxu0 %v404
      %472 = vmatprep.subr.bf16.mxu0 %v402
      %473 = vmatpush1.bf16.msra.mxu0 %v401
      %474 = vmatprep.subr.bf16.mxu0 %v399
      %475 = vmatpush1.bf16.msra.mxu0 %v398
      %476 = vmatprep.subr.bf16.mxu0 0
      %477 = vmatpush2.bf16.msra.mxu0 0
      %478 = vmatprep.subr.bf16.mxu0 0
      %479 = vmatpush2.bf16.msra.mxu0 0
      %480 = vmatprep.subr.bf16.mxu0 0
      %481 = vmatpush2.bf16.msra.mxu0 0
      %482 = vmatprep.subr.bf16.mxu0 0
      %483 = vmatpush2.bf16.msra.mxu0 0
      %484 = vmatprep.subr.bf16.mxu0 0
      %485 = vmatpush2.bf16.msra.mxu0 0
      %486 = vmatprep.subr.bf16.mxu0 0
      %487 = vmatpush2.bf16.msra.mxu0 0
      %488 = vmatprep.subr.bf16.mxu0 0
      %489 = vmatpush2.bf16.msra.mxu0 0
      %490 = vmatprep.subr.bf16.mxu0 0
      %491 = vmatpush2.bf16.msra.mxu0 0
      %492 = vmatprep.mubr.bf16.mxu0 0
      %493 = vmatmul.mubr.bf16.gmra.mxu0 %v445
      %v494 = vpop.f32.mrf.mxu0
      %v495 = vadd.f32 %v416, %v494
      %v496 = vpop.f32.mrf.mxu0
      %v497 = vadd.f32 %v416, %v496
      %v498 = vpop.f32.mrf.mxu0
      %v499 = vadd.f32 %v421, %v498
      %v500 = vpop.f32.mrf.mxu0
      %v501 = vadd.f32 %v421, %v500
      %502 = vmatprep.mubr.bf16.mxu0 0
      %503 = vmatmul.mubr.bf16.gmra.mxu0 %v448
      %v504 = vpop.f32.mrf.mxu0
      %v505 = vadd.f32 %v426, %v504
      %v506 = vpop.f32.mrf.mxu0
      %v507 = vadd.f32 %v426, %v506
      %v508 = vpop.f32.mrf.mxu0
      %v509 = vadd.f32 %v431, %v508
      %v510 = vpop.f32.mrf.mxu0
      %v511 = vadd.f32 %v431, %v510
      %512 = vdwg.mxu0
      %513 = vmatprep.subr.bf16.mxu0 0
      %514 = vmatpush1.bf16.msra.mxu0 0
      %515 = vmatprep.subr.bf16.mxu0 0
      %516 = vmatpush1.bf16.msra.mxu0 0
      %517 = vmatprep.subr.bf16.mxu0 0
      %518 = vmatpush1.bf16.msra.mxu0 0
      %519 = vmatprep.subr.bf16.mxu0 0
      %520 = vmatpush1.bf16.msra.mxu0 %v458
      %521 = vmatprep.subr.bf16.mxu0 0
      %522 = vmatpush1.bf16.msra.mxu0 %v409
      %523 = vmatprep.subr.bf16.mxu0 0
      %524 = vmatpush1.bf16.msra.mxu0 %v406
      %525 = vmatprep.subr.bf16.mxu0 0
      %526 = vmatpush1.bf16.msra.mxu0 %v403
      %527 = vmatprep.subr.bf16.mxu0 0
      %528 = vmatpush1.bf16.msra.mxu0 %v400
      %529 = vmatprep.subr.bf16.mxu0 0
      %530 = vmatpush2.bf16.msra.mxu0 0
      %531 = vmatprep.subr.bf16.mxu0 0
      %532 = vmatpush2.bf16.msra.mxu0 0
      %533 = vmatprep.subr.bf16.mxu0 0
      %534 = vmatpush2.bf16.msra.mxu0 0
      %535 = vmatprep.subr.bf16.mxu0 0
      %536 = vmatpush2.bf16.msra.mxu0 0
      %537 = vmatprep.subr.bf16.mxu0 0
      %538 = vmatpush2.bf16.msra.mxu0 0
      %539 = vmatprep.subr.bf16.mxu0 0
      %540 = vmatpush2.bf16.msra.mxu0 0
      %541 = vmatprep.subr.bf16.mxu0 0
      %542 = vmatpush2.bf16.msra.mxu0 0
      %543 = vmatprep.subr.bf16.mxu0 0
      %544 = vmatpush2.bf16.msra.mxu0 0
      %545 = vmatprep.mubr.bf16.mxu0 0
      %546 = vmatmul.mubr.bf16.gmra.mxu0 %v445
      %v547 = vpop.f32.mrf.mxu0
      %v548 = vadd.f32 %v416, %v547
      %v549 = vpop.f32.mrf.mxu0
      %v550 = vpop.f32.mrf.mxu0
      %v551 = vadd.f32 %v421, %v550
      %v552 = vpop.f32.mrf.mxu0
      %553 = vmatprep.mubr.bf16.mxu0 0
      %554 = vmatmul.mubr.bf16.gmra.mxu0 %v448
      %v555 = vpop.f32.mrf.mxu0
      %v556 = vadd.f32 %v426, %v555
      %v557 = vpop.f32.mrf.mxu0
      %v558 = vpop.f32.mrf.mxu0
      %v559 = vadd.f32 %v431, %v558
      %v560 = vpop.f32.mrf.mxu0
      %561 = vdwg.mxu0
      %v562 = vmax.f32 %v495, 0.0
      %v563 = vmax.f32 %v497, 0.0
      %v564 = vmax.f32 %v548, 0.0
      %v565 = vmax.f32 %v499, 0.0
      %v566 = vmax.f32 %v501, 0.0
      %v567 = vmax.f32 %v551, 0.0
      %v568 = vmax.f32 %v505, 0.0
      %v569 = vmax.f32 %v507, 0.0
      %v570 = vmax.f32 %v556, 0.0
      %v571 = vmax.f32 %v509, 0.0
      %v572 = vmax.f32 %v511, 0.0
      %v573 = vmax.f32 %v559, 0.0
      %v574 = vpack.c.bf16 %v565, %v562
      %v575 = vpack.c.bf16 %v566, %v563
      %v576 = vpack.c.bf16 %v567, %v564
      %v577 = vpack.c.bf16 %v571, %v568
      %v578 = vpack.c.bf16 %v572, %v569
      %v579 = vpack.c.bf16 %v573, %v570
      %581 = vset.pattern.permute.xlu0 0
      %582 = vperm.xlu0 %581, %v290
      %v583 = vpop.permute.xlu0 %582
      %586 = vset.pattern.permute.xlu0 0
      %587 = vperm.xlu0 %586, %v291
      %v588 = vpop.permute.xlu0 %587
      %v592 = vunpack.c.l.b16 %v284
      %v593 = vunpack.c.l.b16 %v285
      %v594 = vpack.c.b16 %v593, %v592
      %vm595 = vcmask 261120
      %v597 = vsel %vm595, %v594, 0
      %599 = vmatprep.subr.bf16.mxu0 0
      %600 = vmatpush1.bf16.msra.mxu0 0
      %601 = vmatprep.subr.bf16.mxu0 0
      %602 = vmatpush1.bf16.msra.mxu0 0
      %603 = vmatprep.subr.bf16.mxu0 0
      %604 = vmatpush1.bf16.msra.mxu0 0
      %605 = vmatprep.subr.bf16.mxu0 0
      %606 = vmatpush1.bf16.msra.mxu0 0
      %607 = vmatprep.subr.bf16.mxu0 0
      %608 = vmatpush1.bf16.msra.mxu0 0
      %609 = vmatprep.subr.bf16.mxu0 0
      %610 = vmatpush1.bf16.msra.mxu0 0
      %611 = vmatprep.subr.bf16.mxu0 %v578
      %612 = vmatpush1.bf16.msra.mxu0 %v577
      %613 = vmatprep.subr.bf16.mxu0 %v575
      %614 = vmatpush1.bf16.msra.mxu0 %v574
      %615 = vmatprep.subr.bf16.mxu0 0
      %616 = vmatpush2.bf16.msra.mxu0 0
      %617 = vmatprep.subr.bf16.mxu0 0
      %618 = vmatpush2.bf16.msra.mxu0 0
      %619 = vmatprep.subr.bf16.mxu0 0
      %620 = vmatpush2.bf16.msra.mxu0 0
      %621 = vmatprep.subr.bf16.mxu0 0
      %622 = vmatpush2.bf16.msra.mxu0 0
      %623 = vmatprep.subr.bf16.mxu0 0
      %624 = vmatpush2.bf16.msra.mxu0 0
      %625 = vmatprep.subr.bf16.mxu0 0
      %626 = vmatpush2.bf16.msra.mxu0 0
      %627 = vmatprep.subr.bf16.mxu0 0
      %628 = vmatpush2.bf16.msra.mxu0 0
      %629 = vmatprep.subr.bf16.mxu0 0
      %630 = vmatpush2.bf16.msra.mxu0 0
      %631 = vmatprep.mubr.bf16.mxu0 0
      %632 = vmatmul.mubr.bf16.gmra.mxu0 %v597
      %v633 = vpop.f32.mrf.mxu0
      %v634 = vadd.f32 %v583, %v633
      %v635 = vpop.f32.mrf.mxu0
      %v636 = vadd.f32 %v583, %v635
      %v637 = vpop.f32.mrf.mxu0
      %v638 = vadd.f32 %v588, %v637
      %v639 = vpop.f32.mrf.mxu0
      %v640 = vadd.f32 %v588, %v639
      %641 = vdwg.mxu0
      %642 = vmatprep.subr.bf16.mxu0 0
      %643 = vmatpush1.bf16.msra.mxu0 0
      %644 = vmatprep.subr.bf16.mxu0 0
      %645 = vmatpush1.bf16.msra.mxu0 0
      %646 = vmatprep.subr.bf16.mxu0 0
      %647 = vmatpush1.bf16.msra.mxu0 0
      %648 = vmatprep.subr.bf16.mxu0 0
      %649 = vmatpush1.bf16.msra.mxu0 0
      %650 = vmatprep.subr.bf16.mxu0 0
      %651 = vmatpush1.bf16.msra.mxu0 0
      %652 = vmatprep.subr.bf16.mxu0 0
      %653 = vmatpush1.bf16.msra.mxu0 0
      %654 = vmatprep.subr.bf16.mxu0 0
      %655 = vmatpush1.bf16.msra.mxu0 %v579
      %656 = vmatprep.subr.bf16.mxu0 0
      %657 = vmatpush1.bf16.msra.mxu0 %v576
      %658 = vmatprep.subr.bf16.mxu0 0
      %659 = vmatpush2.bf16.msra.mxu0 0
      %660 = vmatprep.subr.bf16.mxu0 0
      %661 = vmatpush2.bf16.msra.mxu0 0
      %662 = vmatprep.subr.bf16.mxu0 0
      %663 = vmatpush2.bf16.msra.mxu0 0
      %664 = vmatprep.subr.bf16.mxu0 0
      %665 = vmatpush2.bf16.msra.mxu0 0
      %666 = vmatprep.subr.bf16.mxu0 0
      %667 = vmatpush2.bf16.msra.mxu0 0
      %668 = vmatprep.subr.bf16.mxu0 0
      %669 = vmatpush2.bf16.msra.mxu0 0
      %670 = vmatprep.subr.bf16.mxu0 0
      %671 = vmatpush2.bf16.msra.mxu0 0
      %672 = vmatprep.subr.bf16.mxu0 0
      %673 = vmatpush2.bf16.msra.mxu0 0
      %674 = vmatprep.mubr.bf16.mxu0 0
      %675 = vmatmul.mubr.bf16.gmra.mxu0 %v597
      %v676 = vpop.f32.mrf.mxu0
      %v677 = vadd.f32 %v583, %v676
      %v678 = vpop.f32.mrf.mxu0
      %v679 = vpop.f32.mrf.mxu0
      %v680 = vadd.f32 %v588, %v679
      %v681 = vpop.f32.mrf.mxu0
      %682 = vdwg.mxu0
      %v683 = vxor.u32 %v634, 2147483648
      %v684 = vxor.u32 %v636, 2147483648
      %v685 = vxor.u32 %v677, 2147483648
      %v686 = vxor.u32 %v638, 2147483648
      %v687 = vxor.u32 %v640, 2147483648
      %v688 = vxor.u32 %v680, 2147483648
      %v689 = vmul.f32 %v683, 1.442695
      %v690 = vpow.pop %v689
      %v691 = vmul.f32 %v684, 1.442695
      %v692 = vpow.pop %v691
      %v693 = vmul.f32 %v685, 1.442695
      %v694 = vpow.pop %v693
      %v695 = vmul.f32 %v686, 1.442695
      %v696 = vpow.pop %v695
      %v697 = vmul.f32 %v687, 1.442695
      %v698 = vpow.pop %v697
      %v699 = vmul.f32 %v688, 1.442695
      %v700 = vpow.pop %v699
      %v701 = vadd.f32 %v690, 1.0
      %v702 = vadd.f32 %v692, 1.0
      %v703 = vadd.f32 %v694, 1.0
      %v704 = vadd.f32 %v696, 1.0
      %v705 = vadd.f32 %v698, 1.0
      %v706 = vadd.f32 %v700, 1.0
      %v707 = vrcp.pop %v701
      %v708 = vmul.f32 1.0, %v707
      %v709 = vrcp.pop %v702
      %v710 = vmul.f32 1.0, %v709
      %v711 = vrcp.pop %v703
      %v712 = vmul.f32 1.0, %v711
      %v713 = vrcp.pop %v704
      %v714 = vmul.f32 1.0, %v713
      %v715 = vrcp.pop %v705
      %v716 = vmul.f32 1.0, %v715
      %v717 = vrcp.pop %v706
      %v718 = vmul.f32 1.0, %v717
      %720 = vset.pattern.permute.xlu0 0
      %721 = vperm.xlu0 %720, %v292
      %v722 = vpop.permute.xlu0 %721
      %725 = vset.pattern.permute.xlu0 0
      %726 = vperm.xlu0 %725, %v293
      %v727 = vpop.permute.xlu0 %726
      %v729 = vmul.f32 %v722, %v708
      %v730 = vmul.f32 %v722, %v710
      %v731 = vmul.f32 %v722, %v712
      %v732 = vmul.f32 %v727, %v714
      %v733 = vmul.f32 %v727, %v716
      %v734 = vmul.f32 %v727, %v718
      %736 = vset.pattern.permute.xlu0 0
      %737 = vperm.xlu0 %736, %v294
      %v738 = vpop.permute.xlu0 %737
      %741 = vset.pattern.permute.xlu0 0
      %742 = vperm.xlu0 %741, %v295
      %v743 = vpop.permute.xlu0 %742
      %v745 = vadd.f32 %v729, %v738
      %v746 = vadd.f32 %v730, %v738
      %v747 = vadd.f32 %v731, %v738
      %v748 = vadd.f32 %v732, %v743
      %v749 = vadd.f32 %v733, %v743
      %v750 = vadd.f32 %v734, %v743
      %751 = vst [vmem:[%s278] sm:$0xff] %v745
      %752 = vst [vmem:[%s278 + $0x8] sm:$0xff] %v746
      %753 = vst.msk [vmem:[%s278 + $0x10] sm:$0xff] %vm595, %v747
      %754 = vst [vmem:[%s278 + $0x18] sm:$0xff] %v748
      %755 = vst [vmem:[%s278 + $0x20] sm:$0xff] %v749
      %756 = vst.msk [vmem:[%s278 + $0x28] sm:$0xff] %vm595, %v750
      %p757 = scmp.lt.s32.totalorder %s18, 1
      %s758 = scalar_select %p757, %s18, 1
      %s759 = smul.addr %s758, 6
      %s760 = smul.addr %s759, 8
      %s761 = scalar_lea.vmem %s7, %s760
      // Predicated region
      $region49: #{_lambda_.1} parent=47 // pred_check
        %p762 = pneg %p188
      $region50: #{_lambda_.1} parent=47 // pred_check_branch
        %764 = sbr.rel (%p762) target = $region52
      $region51: #{_lambda_.1} parent=47 // pred_region
        _
      $region52: #{_lambda_.1} parent=47 // pred_fallthru
        _
    $region48: #{_lambda_.1} parent=5 // pred_fallthru
      _
    %p765 = scmp.le.s32.totalorder 2, %s13
    // Predicated region
    $region53: #{_lambda_.1} parent=5 // pred_check
      %p766 = pneg %p765
    $region54: #{_lambda_.1} parent=5 // pred_check_branch
      %768 = sbr.rel (%p766) target = $region56
    $region55: #{_lambda_.1} parent=5 // pred_region
      %s769 = ssub.s32 %s13, 2
      // Predicated region
      $region57: #{_lambda_.1} parent=55 // pred_check
        %p770 = pneg %p194
      $region58: #{_lambda_.1} parent=55 // pred_check_branch
        %772 = sbr.rel (%p770) target = $region60
      $region59: #{_lambda_.1} parent=55 // pred_region
        %p773 = scmp.lt.s32.totalorder %s19, 1
        %s774 = scalar_select %p773, %s19, 1
        %s775 = smul.addr %s774, 6
        %s776 = smul.addr %s775, 8
        %s777 = scalar_lea.vmem %s7, %s776
      $region60: #{_lambda_.1} parent=55 // pred_fallthru
        _
    $region56: #{_lambda_.1} parent=5 // pred_fallthru
      _
  $region6: #{_lambda_.1} parent=0 // loop_footer
    %s17 = sadd.s32 1, %s13
  $region7: #{_lambda_.1} parent=0 // loop_footer_branch
    %12 = sbr.rel target = $region3
  $region8: #{_lambda_.1} parent=0 // loop_exit
    _

</llo_original>
